<compile_context>
chip_gen: v5e
topology: v5e:2x2
jax: 0.10.0
libtpu: 0.0.40
codegen_flags: <defaults>
</compile_context>

<pallas_src>
import jax
import jax.numpy as jnp
from jax.experimental import pallas as pl
from jax.experimental.pallas import tpu as pltpu

# ---- problem sizes (small, consistent with the module) ----
B = 2                            # batch
OBS_C, H, W = 4, 16, 16          # obs_shape = (4, 16, 16)
ACT_DIM = 8                      # action_shape = (8,)
N = 4                            # cyclic group C4
HID = 32                         # hidden_dim == encoder_feature_dim
REG = HID * N                    # regular-repr channel count = 128
OBS_FLAT = OBS_C * H * W         # 1024
MERGED = 2 * REG                 # both Q heads side by side = 256 lanes
GSTRIDE = 2 * HID                # lane stride between group copies in merged layout = 64

# GroupPooling is done as a 2-step halving max tree over the merged lanes; that requires
# exactly N=4 group copies laid out group-outermost.
assert N == 4 and MERGED == 4 * GSTRIDE and REG == 2 * GSTRIDE

# rows of the packed small-parameter operand (one DMA for all tiny f32 params)
ROW_W1B = 0                      # rows 0..7  : conv1 rows for the raw action columns
ROW_B1 = 8                       # row  8     : merged conv1 bias (256 lanes)
ROW_BENC = 9                     # row  9     : encoder bias, lanes 0:128
ROW_B2 = 10                      # row 10     : final conv biases in lanes 0:2
SMALL_ROWS = 16                  # padded to 2 sublane tiles


def _critic_kernel(obs_ref, act_ref, wenc_ref, w1a_ref, small_ref, w2_ref, q_ref):
    # obs_ref : (B, OBS_FLAT) bf16   raw pixels (1/255 folded into wenc)
    # act_ref : (B, 8)        f32    raw action (column permutation folded into w1b rows)
    # wenc_ref: (OBS_FLAT, REG) bf16 stand-in encoder weights (pre-scaled by 1/255)
    # w1a_ref : (REG, MERGED) bf16   merged Q1/Q2 conv1 rows for conv_out
    # small_ref: (16, MERGED) f32    packed {w1b, b1, b_enc, b2}
    # w2_ref  : (2*HID, 2)    f32    final 1x1 trivial convs, head1 -> col 0, head2 -> col 1
    # q_ref   : (B, 2)        f32    [q1, q2]

    # --- encoder stand-in: dense (scale folded in) + bias + ReLU, field-major regular output ---
    e = jnp.dot(obs_ref[...], wenc_ref[...], preferred_element_type=jnp.float32)
    e = jnp.maximum(e + small_ref[ROW_BENC:ROW_BENC + 1, 0:REG], 0.0)       # (B, REG) f32

    # --- merged 1x1 R2Conv for both heads + ReLU ---
    # output lane = g*64 + head*32 + field  (group index outermost)
    z = (jnp.dot(e.astype(jnp.bfloat16), w1a_ref[...],
                 preferred_element_type=jnp.float32)
         + jnp.dot(act_ref[...], small_ref[ROW_W1B:ROW_W1B + ACT_DIM, :],
                   preferred_element_type=jnp.float32)
         + small_ref[ROW_B1:ROW_B1 + 1, :])
    z = jnp.maximum(z, 0.0)                                                 # (B, MERGED)

    # --- GroupPooling: max over the N=4 group copies (group index is the outermost lane
    #     block), done as two halving steps with static lane slices.  The first split is at
    #     the 128-lane vreg boundary (free view); only the second needs a 64-lane shift. ---
    m = jnp.maximum(z[:, :REG], z[:, REG:])                                 # (B, 128)
    m = jnp.maximum(m[:, :GSTRIDE], m[:, GSTRIDE:])                         # (B, 64)
    # m lanes 0:HID = head-1 pooled fields, HID:2*HID = head-2 pooled fields

    # --- final 1x1 trivial convs for both heads as one MXU dot ---
    q = jnp.dot(m, w2_ref[...], preferred_element_type=jnp.float32)         # (B, 2)
    q_ref[...] = q + small_ref[ROW_B2:ROW_B2 + 1, 0:2]


def make_params(key):
    ks = jax.random.split(key, 4)

    # --- encoder stand-in (regular-repr output => per-field bias repeated N times) ---
    w_enc = jax.random.normal(ks[0], (OBS_FLAT, REG), jnp.float32) * (1.0 / jnp.sqrt(OBS_FLAT))
    w_enc = (w_enc * (1.0 / 255.0)).astype(jnp.bfloat16)     # fold obs/255 into weights (f32 fold)
    b_enc_field = jax.random.normal(ks[1], (HID,), jnp.float32) * 0.01
    b_enc = jnp.repeat(b_enc_field, N)                       # field-major (channel = f*N + g)

    # --- Q heads ---
    C_IN = REG + ACT_DIM                                     # hidden*regular + 4 trivial + 2 irrep(1)
    w1_heads, b1f_heads, w2_heads, b2_heads = [], [], [], []
    for h in range(2):
        k = jax.random.split(ks[2 + h], 4)
        # conv1 synthetic weights, (C_in, C_out) with escnn field-major output columns (col = f*N + g)
        w1_heads.append(jax.random.normal(k[0], (C_IN, REG), jnp.float32) * (1.0 / jnp.sqrt(C_IN)))
        b1f_heads.append(jax.random.normal(k[1], (HID,), jnp.float32) * 0.01)
        w2_heads.append(jax.random.normal(k[2], (HID,), jnp.float32) * (1.0 / jnp.sqrt(HID)))
        b2_heads.append(jax.random.normal(k[3], (), jnp.float32) * 0.01)

    # merge both heads; destination lane = g*(2*HID) + h*HID + f  (group-outermost layout)
    w1_both = jnp.stack(w1_heads, axis=1)                    # (C_IN, 2, REG), cols = f*N + g
    w1_both = w1_both.reshape(C_IN, 2, HID, N)               # (C_IN, h, f, g)
    W1 = w1_both.transpose(0, 3, 1, 2).reshape(C_IN, MERGED)  # (C_IN, g, h, f)

    w1a = W1[:REG, :].astype(jnp.bfloat16)                   # rows: conv_out (field-major)

    # rows REG..REG+7 are in cat order [inv_act(4), dxy(4)]; fold the action column
    # permutation (inv_act = action[:,1::2], dxy = action[:,0::2]) into the rows so the
    # kernel consumes the raw action tensor directly: raw col j -> cat row row_perm[j].
    row_perm = jnp.array([4, 0, 5, 1, 6, 2, 7, 3], dtype=jnp.int32)
    w1b = W1[REG:, :][row_perm, :]                           # (8, MERGED)

    # per-field conv1 bias, tiled over group copies in the merged layout
    b1 = jnp.broadcast_to(jnp.stack(b1f_heads, axis=0)[None, :, :],
                          (N, 2, HID)).reshape(MERGED)

    # final conv weights as one (2*HID, 2) MXU RHS: rows 0:HID -> q1 col, HID:2*HID -> q2 col
    w2 = jnp.zeros((2 * HID, 2), jnp.float32)
    w2 = w2.at[0:HID, 0].set(w2_heads[0]).at[HID:2 * HID, 1].set(w2_heads[1])
    b2 = jnp.stack(b2_heads)                                 # (2,)

    # pack all remaining small f32 params into a single operand (one HBM->VMEM DMA)
    small = jnp.zeros((SMALL_ROWS, MERGED), jnp.float32)
    small = small.at[ROW_W1B:ROW_W1B + ACT_DIM, :].set(w1b)
    small = small.at[ROW_B1, :].set(b1)
    small = small.at[ROW_BENC, 0:REG].set(b_enc)
    small = small.at[ROW_B2, 0:2].set(b2)

    return (w_enc, w1a, small, w2)


@jax.jit
def critic_equivariant_forward(obs, action, params):
    """obs: (B, C, H, W) float in [0, 255] (NCHW, like PyTorch); action: (B, 8)."""
    bsz = obs.shape[0]
    # 1/255 is folded into the encoder weights, so the kernel takes raw pixels (in bf16 to
    # halve the obs DMA and skip the in-kernel cast).
    obs_flat = obs.reshape(bsz, -1).astype(jnp.bfloat16)
    action = action.reshape(bsz, -1).astype(jnp.float32)

    vmem = pl.BlockSpec(memory_space=pltpu.MemorySpace.VMEM)
    q = pl.pallas_call(
        _critic_kernel,
        out_shape=jax.ShapeDtypeStruct((bsz, 2), jnp.float32),
        in_specs=[vmem] * (2 + len(params)),
        out_specs=vmem,
    )(obs_flat, action, *params)
    return q[:, 0:1], q[:, 1:2]


def _reference_forward(obs, action, params):
    """Pure-JAX f32 mirror of the kernel math (for tolerance validation)."""
    w_enc, w1a, small, w2 = params
    bsz = obs.shape[0]
    x = obs.reshape(bsz, -1).astype(jnp.float32)
    a = action.reshape(bsz, -1).astype(jnp.float32)
    e = jnp.maximum(x @ w_enc.astype(jnp.float32) + small[ROW_BENC, 0:REG], 0.0)
    z = (e @ w1a.astype(jnp.float32)
         + a @ small[ROW_W1B:ROW_W1B + ACT_DIM, :]
         + small[ROW_B1, :])
    z = jnp.maximum(z, 0.0)
    m = jnp.maximum(z[:, :REG], z[:, REG:])
    m = jnp.maximum(m[:, :GSTRIDE], m[:, GSTRIDE:])
    q = m @ w2 + small[ROW_B2, 0:2]
    return q[:, 0:1], q[:, 1:2]


if __name__ == "__main__":
    key = jax.random.PRNGKey(0)
    k_obs, k_act, k_par = jax.random.split(key, 3)

    obs = jax.random.uniform(k_obs, (B, OBS_C, H, W), jnp.float32, 0.0, 255.0)
    action = jax.random.uniform(k_act, (B, ACT_DIM), jnp.float32, -1.0, 1.0)
    params = make_params(k_par)

    q1, q2 = critic_equivariant_forward(obs, action, params)
    jax.block_until_ready((q1, q2))

    assert q1.shape == (B, 1) and q2.shape == (B, 1)
    assert bool(jnp.all(jnp.isfinite(q1))) and bool(jnp.all(jnp.isfinite(q2)))

    # validate against the pure-JAX f32 reference (bf16 weight/activation storage in the
    # kernel gives ~1e-2 relative deviation; use a generous tolerance)
    r1, r2 = _reference_forward(obs, action, params)
    assert bool(jnp.allclose(q1, r1, atol=1e-1, rtol=1e-1)), (q1, r1)
    assert bool(jnp.allclose(q2, r2, atol=1e-1, rtol=1e-1)), (q2, r2)

    print("KERNEL_OK")
</pallas_src>

<mosaic_0001>
module attributes {stable_mosaic.version = 11 : i64} {
  func.func @_critic_kernel(%arg0: memref<2x1024xbf16, #tpu.memory_space<vmem>>, %arg1: memref<2x8xf32, #tpu.memory_space<vmem>>, %arg2: memref<1024x128xbf16, #tpu.memory_space<vmem>>, %arg3: memref<128x256xbf16, #tpu.memory_space<vmem>>, %arg4: memref<16x256xf32, #tpu.memory_space<vmem>>, %arg5: memref<64x2xf32, #tpu.memory_space<vmem>>, %arg6: memref<2x2xf32, #tpu.memory_space<vmem>>) attributes {dimension_semantics = [], scalar_prefetch = 0 : i64, scratch_operands = 0 : i64, tpu.core_type = #tpu.core_type<tc>} {
    %c0 = arith.constant 0 : index
    %c0_0 = arith.constant 0 : index
    %0 = vector.load %arg0[%c0, %c0_0] : memref<2x1024xbf16, #tpu.memory_space<vmem>>, vector<2x1024xbf16>
    %c0_1 = arith.constant 0 : index
    %c0_2 = arith.constant 0 : index
    %1 = vector.load %arg2[%c0_1, %c0_2] : memref<1024x128xbf16, #tpu.memory_space<vmem>>, vector<1024x128xbf16>
    %cst = arith.constant dense<0.000000e+00> : vector<2x128xf32>
    %2 = tpu.matmul %0, %1, %cst {dimension_numbers = #tpu.dot_dimension_numbers<[1], [0], [0], [1], [0, 0, 1, 1], [], []>} : vector<2x1024xbf16>, vector<1024x128xbf16>, vector<2x128xf32> -> vector<2x128xf32>
    %c9 = arith.constant 9 : index
    %c0_3 = arith.constant 0 : index
    %3 = vector.load %arg4[%c9, %c0_3] : memref<16x256xf32, #tpu.memory_space<vmem>>, vector<1x128xf32>
    %4 = vector.broadcast %3 : vector<1x128xf32> to vector<2x128xf32>
    %5 = arith.addf %2, %4 : vector<2x128xf32>
    %cst_4 = arith.constant 0.000000e+00 : f32
    %6 = vector.broadcast %cst_4 : f32 to vector<2x128xf32>
    %7 = arith.maximumf %5, %6 : vector<2x128xf32>
    %8 = arith.truncf %7 : vector<2x128xf32> to vector<2x128xbf16>
    %c0_5 = arith.constant 0 : index
    %c0_6 = arith.constant 0 : index
    %9 = vector.load %arg3[%c0_5, %c0_6] : memref<128x256xbf16, #tpu.memory_space<vmem>>, vector<128x256xbf16>
    %cst_7 = arith.constant dense<0.000000e+00> : vector<2x256xf32>
    %10 = tpu.matmul %8, %9, %cst_7 {dimension_numbers = #tpu.dot_dimension_numbers<[1], [0], [0], [1], [0, 0, 1, 1], [], []>} : vector<2x128xbf16>, vector<128x256xbf16>, vector<2x256xf32> -> vector<2x256xf32>
    %c0_8 = arith.constant 0 : index
    %c0_9 = arith.constant 0 : index
    %11 = vector.load %arg1[%c0_8, %c0_9] : memref<2x8xf32, #tpu.memory_space<vmem>>, vector<2x8xf32>
    %c0_10 = arith.constant 0 : index
    %c0_11 = arith.constant 0 : index
    %12 = vector.load %arg4[%c0_10, %c0_11] : memref<16x256xf32, #tpu.memory_space<vmem>>, vector<8x256xf32>
    %cst_12 = arith.constant dense<0.000000e+00> : vector<2x256xf32>
    %13 = tpu.matmul %11, %12, %cst_12 {dimension_numbers = #tpu.dot_dimension_numbers<[1], [0], [0], [1], [0, 0, 1, 1], [], []>} : vector<2x8xf32>, vector<8x256xf32>, vector<2x256xf32> -> vector<2x256xf32>
    %14 = arith.addf %10, %13 : vector<2x256xf32>
    %c8 = arith.constant 8 : index
    %c0_13 = arith.constant 0 : index
    %15 = vector.load %arg4[%c8, %c0_13] : memref<16x256xf32, #tpu.memory_space<vmem>>, vector<1x256xf32>
    %16 = vector.broadcast %15 : vector<1x256xf32> to vector<2x256xf32>
    %17 = arith.addf %14, %16 : vector<2x256xf32>
    %cst_14 = arith.constant 0.000000e+00 : f32
    %18 = vector.broadcast %cst_14 : f32 to vector<2x256xf32>
    %19 = arith.maximumf %17, %18 : vector<2x256xf32>
    %20 = vector.extract_strided_slice %19 {offsets = [0, 0], sizes = [2, 128], strides = [1, 1]} : vector<2x256xf32> to vector<2x128xf32>
    %21 = vector.extract_strided_slice %19 {offsets = [0, 128], sizes = [2, 128], strides = [1, 1]} : vector<2x256xf32> to vector<2x128xf32>
    %22 = arith.maximumf %20, %21 : vector<2x128xf32>
    %23 = vector.extract_strided_slice %22 {offsets = [0, 0], sizes = [2, 64], strides = [1, 1]} : vector<2x128xf32> to vector<2x64xf32>
    %24 = vector.extract_strided_slice %22 {offsets = [0, 64], sizes = [2, 64], strides = [1, 1]} : vector<2x128xf32> to vector<2x64xf32>
    %25 = arith.maximumf %23, %24 : vector<2x64xf32>
    %c0_15 = arith.constant 0 : index
    %c0_16 = arith.constant 0 : index
    %26 = vector.load %arg5[%c0_15, %c0_16] : memref<64x2xf32, #tpu.memory_space<vmem>>, vector<64x2xf32>
    %cst_17 = arith.constant dense<0.000000e+00> : vector<2x2xf32>
    %27 = tpu.matmul %25, %26, %cst_17 {dimension_numbers = #tpu.dot_dimension_numbers<[1], [0], [0], [1], [0, 0, 1, 1], [], []>} : vector<2x64xf32>, vector<64x2xf32>, vector<2x2xf32> -> vector<2x2xf32>
    %c10 = arith.constant 10 : index
    %c0_18 = arith.constant 0 : index
    %28 = vector.load %arg4[%c10, %c0_18] : memref<16x256xf32, #tpu.memory_space<vmem>>, vector<1x2xf32>
    %29 = vector.broadcast %28 : vector<1x2xf32> to vector<2x2xf32>
    %30 = arith.addf %27, %29 : vector<2x2xf32>
    %c0_19 = arith.constant 0 : index
    %c0_20 = arith.constant 0 : index
    %31 = vector.load %arg6[%c0_19, %c0_20] : memref<2x2xf32, #tpu.memory_space<vmem>>, vector<2x2xf32>
    tpu.vector_store %arg6[%c0_19, %c0_20], %30 {strides = array<i32>} : memref<2x2xf32, #tpu.memory_space<vmem>>, vector<2x2xf32>,
    return
  }
}

</mosaic_0001>

<llo_original>
// kernel: critic_equivariant_forward.1
$region0: #{critic_equivariant_forward.1}
  #allocation0 [shape = 'u32[]', space=smem, size = 0x4, offset = 0x4, fixed_abs, tag = 'smem constant byte address 0x4 - core index']
  #allocation1 [shape = 'u32[72,128]{1,0:T(1,128)}', space=vmem, size = 0x9000, scoped, tag = 'internal scratch']
  %s0 = inlined_call_operand.vmem [shape: bf16[2,1024], index: 0, kind: input, shape index: {}]
  %s1 = inlined_call_operand.vmem [shape: f32[2,8], index: 1, kind: input, shape index: {}]
  %s2 = inlined_call_operand.hbm [shape: bf16[1024,128], index: 2, kind: input, shape index: {}]
  %s3 = inlined_call_operand.vmem [shape: bf16[128,256], index: 3, kind: input, shape index: {}]
  %s4 = inlined_call_operand.vmem [shape: f32[16,256], index: 4, kind: input, shape index: {}]
  %s5 = inlined_call_operand.vmem [shape: f32[64,2], index: 5, kind: input, shape index: {}]
  %s6 = inlined_call_operand.vmem [shape: f32[2,2], index: 6, kind: output, shape index: {}]
  %s7 = sld [smem:[#allocation0]]
  $region38: #{critic_equivariant_forward.1} parent=0
    _
  %s9 = ssub.s32 1, %s7
  %s10 = scalar_select 0, %s9, %s7
  $region1: #{critic_equivariant_forward.1} parent=0
    #allocation2 [shape = 'u8[262144]{0}', space=vmem, size = 0x40000, scoped, tag = 'input window, operand 2, single buffered']
    #allocation3 [shape = 's32[1]{0}', space=sflag, size = 0x4, scoped, tag = 'scoped memory for critic_equivariant_forward.1']
    %11 = vsyncpa [#allocation3], 0
    // Predicated region
    $region2: #{critic_equivariant_forward.1} parent=1 // pred_check
      _
    $region3: #{critic_equivariant_forward.1} parent=1 // pred_check_branch
      %13 = sbr.rel (0) target = $region5
    $region4: #{critic_equivariant_forward.1} parent=1 // pred_region
      _
    $region5: #{critic_equivariant_forward.1} parent=1 // pred_fallthru
      _
    // Predicated region
    $region6: #{critic_equivariant_forward.1} parent=1 // pred_check
      _
    $region7: #{critic_equivariant_forward.1} parent=1 // pred_check_branch
      %15 = sbr.rel (0) target = $region9
    $region8: #{critic_equivariant_forward.1} parent=1 // pred_region
      _
    $region9: #{critic_equivariant_forward.1} parent=1 // pred_fallthru
      _
    // Predicated region
    $region10: #{critic_equivariant_forward.1} parent=1 // pred_check
      _
    $region11: #{critic_equivariant_forward.1} parent=1 // pred_check_branch
      %17 = sbr.rel (0) target = $region13
    $region12: #{critic_equivariant_forward.1} parent=1 // pred_region
      %19 = vsyncadd [#allocation3], 0
      %s20 = sshll.u32 %s2, 4
      %s21 = int_to_ptr.hbm [resolvable:$true] %s20
      %s22 = sshll.u32 [#allocation2], 4
      %s23 = int_to_ptr.vmem [resolvable:$true] %s22
      %28 = dma.hbm_to_vmem [thread:$0]  %s21, 8192, %s23, [#allocation3], 64, 64, 4
    $region13: #{critic_equivariant_forward.1} parent=1 // pred_fallthru
      _
    // Predicated region
    $region14: #{critic_equivariant_forward.1} parent=1 // pred_check
      _
    $region15: #{critic_equivariant_forward.1} parent=1 // pred_check_branch
      %30 = sbr.rel (0) target = $region17
    $region16: #{critic_equivariant_forward.1} parent=1 // pred_region
      _
    $region17: #{critic_equivariant_forward.1} parent=1 // pred_fallthru
      _
    // Predicated region
    $region18: #{critic_equivariant_forward.1} parent=1 // pred_check
      _
    $region19: #{critic_equivariant_forward.1} parent=1 // pred_check_branch
      %32 = sbr.rel (0) target = $region21
    $region20: #{critic_equivariant_forward.1} parent=1 // pred_region
      _
    $region21: #{critic_equivariant_forward.1} parent=1 // pred_fallthru
      _
    // Predicated region
    $region22: #{critic_equivariant_forward.1} parent=1 // pred_check
      _
    $region23: #{critic_equivariant_forward.1} parent=1 // pred_check_branch
      %34 = sbr.rel (0) target = $region25
    $region24: #{critic_equivariant_forward.1} parent=1 // pred_region
      _
    $region25: #{critic_equivariant_forward.1} parent=1 // pred_fallthru
      _
    // Predicated region
    $region26: #{critic_equivariant_forward.1} parent=1 // pred_check
      _
    $region27: #{critic_equivariant_forward.1} parent=1 // pred_check_branch
      %36 = sbr.rel (0) target = $region29
    $region28: #{critic_equivariant_forward.1} parent=1 // pred_region
      %38 = dma.done [#allocation3], 8192
    $region29: #{critic_equivariant_forward.1} parent=1 // pred_fallthru
      _
    %v39 = vld [vmem:[%s0] sm:$0xff]
    %v40 = vld [vmem:[#allocation2] sm:$0xf]
    %v41 = vld [vmem:[#allocation2 + $0x4] sm:$0xf]
    %v42 = vld [vmem:[#allocation2 + $0x8] sm:$0xf]
    %v43 = vld [vmem:[#allocation2 + $0xc] sm:$0xf]
    %v44 = vld [vmem:[#allocation2 + $0x10] sm:$0xf]
    %v45 = vld [vmem:[#allocation2 + $0x14] sm:$0xf]
    %v46 = vld [vmem:[#allocation2 + $0x18] sm:$0xf]
    %v47 = vld [vmem:[#allocation2 + $0x1c] sm:$0xf]
    %v48 = vld [vmem:[#allocation2 + $0x20] sm:$0xf]
    %v49 = vld [vmem:[#allocation2 + $0x24] sm:$0xf]
    %v50 = vld [vmem:[#allocation2 + $0x28] sm:$0xf]
    %v51 = vld [vmem:[#allocation2 + $0x2c] sm:$0xf]
    %v52 = vld [vmem:[#allocation2 + $0x30] sm:$0xf]
    %v53 = vld [vmem:[#allocation2 + $0x34] sm:$0xf]
    %v54 = vld [vmem:[#allocation2 + $0x38] sm:$0xf]
    %v55 = vld [vmem:[#allocation2 + $0x3c] sm:$0xf]
    %v56 = vld [vmem:[#allocation2 + $0x40] sm:$0xf]
    %v57 = vld [vmem:[#allocation2 + $0x44] sm:$0xf]
    %v58 = vld [vmem:[#allocation2 + $0x48] sm:$0xf]
    %v59 = vld [vmem:[#allocation2 + $0x4c] sm:$0xf]
    %v60 = vld [vmem:[#allocation2 + $0x50] sm:$0xf]
    %v61 = vld [vmem:[#allocation2 + $0x54] sm:$0xf]
    %v62 = vld [vmem:[#allocation2 + $0x58] sm:$0xf]
    %v63 = vld [vmem:[#allocation2 + $0x5c] sm:$0xf]
    %v64 = vld [vmem:[#allocation2 + $0x60] sm:$0xf]
    %v65 = vld [vmem:[#allocation2 + $0x64] sm:$0xf]
    %v66 = vld [vmem:[#allocation2 + $0x68] sm:$0xf]
    %v67 = vld [vmem:[#allocation2 + $0x6c] sm:$0xf]
    %v68 = vld [vmem:[#allocation2 + $0x70] sm:$0xf]
    %v69 = vld [vmem:[#allocation2 + $0x74] sm:$0xf]
    %v70 = vld [vmem:[#allocation2 + $0x78] sm:$0xf]
    %v71 = vld [vmem:[#allocation2 + $0x7c] sm:$0xf]
    %v72 = vld [vmem:[#allocation2 + $0x80] sm:$0xf]
    %v73 = vld [vmem:[#allocation2 + $0x84] sm:$0xf]
    %v74 = vld [vmem:[#allocation2 + $0x88] sm:$0xf]
    %v75 = vld [vmem:[#allocation2 + $0x8c] sm:$0xf]
    %v76 = vld [vmem:[#allocation2 + $0x90] sm:$0xf]
    %v77 = vld [vmem:[#allocation2 + $0x94] sm:$0xf]
    %v78 = vld [vmem:[#allocation2 + $0x98] sm:$0xf]
    %v79 = vld [vmem:[#allocation2 + $0x9c] sm:$0xf]
    %v80 = vld [vmem:[#allocation2 + $0xa0] sm:$0xf]
    %v81 = vld [vmem:[#allocation2 + $0xa4] sm:$0xf]
    %v82 = vld [vmem:[#allocation2 + $0xa8] sm:$0xf]
    %v83 = vld [vmem:[#allocation2 + $0xac] sm:$0xf]
    %v84 = vld [vmem:[#allocation2 + $0xb0] sm:$0xf]
    %v85 = vld [vmem:[#allocation2 + $0xb4] sm:$0xf]
    %v86 = vld [vmem:[#allocation2 + $0xb8] sm:$0xf]
    %v87 = vld [vmem:[#allocation2 + $0xbc] sm:$0xf]
    %v88 = vld [vmem:[#allocation2 + $0xc0] sm:$0xf]
    %v89 = vld [vmem:[#allocation2 + $0xc4] sm:$0xf]
    %v90 = vld [vmem:[#allocation2 + $0xc8] sm:$0xf]
    %v91 = vld [vmem:[#allocation2 + $0xcc] sm:$0xf]
    %v92 = vld [vmem:[#allocation2 + $0xd0] sm:$0xf]
    %v93 = vld [vmem:[#allocation2 + $0xd4] sm:$0xf]
    %v94 = vld [vmem:[#allocation2 + $0xd8] sm:$0xf]
    %v95 = vld [vmem:[#allocation2 + $0xdc] sm:$0xf]
    %v96 = vld [vmem:[#allocation2 + $0xe0] sm:$0xf]
    %v97 = vld [vmem:[#allocation2 + $0xe4] sm:$0xf]
    %v98 = vld [vmem:[#allocation2 + $0xe8] sm:$0xf]
    %v99 = vld [vmem:[#allocation2 + $0xec] sm:$0xf]
    %v100 = vld [vmem:[#allocation2 + $0xf0] sm:$0xf]
    %v101 = vld [vmem:[#allocation2 + $0xf4] sm:$0xf]
    %v102 = vld [vmem:[#allocation2 + $0xf8] sm:$0xf]
    %v103 = vld [vmem:[#allocation2 + $0xfc] sm:$0xf]
    %v104 = vld [vmem:[#allocation2 + $0x100] sm:$0xf]
    %v105 = vld [vmem:[#allocation2 + $0x104] sm:$0xf]
    %v106 = vld [vmem:[#allocation2 + $0x108] sm:$0xf]
    %v107 = vld [vmem:[#allocation2 + $0x10c] sm:$0xf]
    %v108 = vld [vmem:[#allocation2 + $0x110] sm:$0xf]
    %v109 = vld [vmem:[#allocation2 + $0x114] sm:$0xf]
    %v110 = vld [vmem:[#allocation2 + $0x118] sm:$0xf]
    %v111 = vld [vmem:[#allocation2 + $0x11c] sm:$0xf]
    %v112 = vld [vmem:[#allocation2 + $0x120] sm:$0xf]
    %v113 = vld [vmem:[#allocation2 + $0x124] sm:$0xf]
    %v114 = vld [vmem:[#allocation2 + $0x128] sm:$0xf]
    %v115 = vld [vmem:[#allocation2 + $0x12c] sm:$0xf]
    %v116 = vld [vmem:[#allocation2 + $0x130] sm:$0xf]
    %v117 = vld [vmem:[#allocation2 + $0x134] sm:$0xf]
    %v118 = vld [vmem:[#allocation2 + $0x138] sm:$0xf]
    %v119 = vld [vmem:[#allocation2 + $0x13c] sm:$0xf]
    %v120 = vld [vmem:[#allocation2 + $0x140] sm:$0xf]
    %v121 = vld [vmem:[#allocation2 + $0x144] sm:$0xf]
    %v122 = vld [vmem:[#allocation2 + $0x148] sm:$0xf]
    %v123 = vld [vmem:[#allocation2 + $0x14c] sm:$0xf]
    %v124 = vld [vmem:[#allocation2 + $0x150] sm:$0xf]
    %v125 = vld [vmem:[#allocation2 + $0x154] sm:$0xf]
    %v126 = vld [vmem:[#allocation2 + $0x158] sm:$0xf]
    %v127 = vld [vmem:[#allocation2 + $0x15c] sm:$0xf]
    %v128 = vld [vmem:[#allocation2 + $0x160] sm:$0xf]
    %v129 = vld [vmem:[#allocation2 + $0x164] sm:$0xf]
    %v130 = vld [vmem:[#allocation2 + $0x168] sm:$0xf]
    %v131 = vld [vmem:[#allocation2 + $0x16c] sm:$0xf]
    %v132 = vld [vmem:[#allocation2 + $0x170] sm:$0xf]
    %v133 = vld [vmem:[#allocation2 + $0x174] sm:$0xf]
    %v134 = vld [vmem:[#allocation2 + $0x178] sm:$0xf]
    %v135 = vld [vmem:[#allocation2 + $0x17c] sm:$0xf]
    %v136 = vld [vmem:[#allocation2 + $0x180] sm:$0xf]
    %v137 = vld [vmem:[#allocation2 + $0x184] sm:$0xf]
    %v138 = vld [vmem:[#allocation2 + $0x188] sm:$0xf]
    %v139 = vld [vmem:[#allocation2 + $0x18c] sm:$0xf]
    %v140 = vld [vmem:[#allocation2 + $0x190] sm:$0xf]
    %v141 = vld [vmem:[#allocation2 + $0x194] sm:$0xf]
    %v142 = vld [vmem:[#allocation2 + $0x198] sm:$0xf]
    %v143 = vld [vmem:[#allocation2 + $0x19c] sm:$0xf]
    %v144 = vld [vmem:[#allocation2 + $0x1a0] sm:$0xf]
    %v145 = vld [vmem:[#allocation2 + $0x1a4] sm:$0xf]
    %v146 = vld [vmem:[#allocation2 + $0x1a8] sm:$0xf]
    %v147 = vld [vmem:[#allocation2 + $0x1ac] sm:$0xf]
    %v148 = vld [vmem:[#allocation2 + $0x1b0] sm:$0xf]
    %v149 = vld [vmem:[#allocation2 + $0x1b4] sm:$0xf]
    %v150 = vld [vmem:[#allocation2 + $0x1b8] sm:$0xf]
    %v151 = vld [vmem:[#allocation2 + $0x1bc] sm:$0xf]
    %v152 = vld [vmem:[#allocation2 + $0x1c0] sm:$0xf]
    %v153 = vld [vmem:[#allocation2 + $0x1c4] sm:$0xf]
    %v154 = vld [vmem:[#allocation2 + $0x1c8] sm:$0xf]
    %v155 = vld [vmem:[#allocation2 + $0x1cc] sm:$0xf]
    %v156 = vld [vmem:[#allocation2 + $0x1d0] sm:$0xf]
    %v157 = vld [vmem:[#allocation2 + $0x1d4] sm:$0xf]
    %v158 = vld [vmem:[#allocation2 + $0x1d8] sm:$0xf]
    %v159 = vld [vmem:[#allocation2 + $0x1dc] sm:$0xf]
    %v160 = vld [vmem:[#allocation2 + $0x1e0] sm:$0xf]
    %v161 = vld [vmem:[#allocation2 + $0x1e4] sm:$0xf]
    %v162 = vld [vmem:[#allocation2 + $0x1e8] sm:$0xf]
    %v163 = vld [vmem:[#allocation2 + $0x1ec] sm:$0xf]
    %v164 = vld [vmem:[#allocation2 + $0x1f0] sm:$0xf]
    %v165 = vld [vmem:[#allocation2 + $0x1f4] sm:$0xf]
    %v166 = vld [vmem:[#allocation2 + $0x1f8] sm:$0xf]
    %v167 = vld [vmem:[#allocation2 + $0x1fc] sm:$0xf]
    %v168 = vld [vmem:[%s4 + $0x11] ss:$0 sm:$0xff]
    %170 = vst [vmem:[#allocation1] ss:$9 sm:$0xff] %v39
    %v171 = vld [vmem:[#allocation1] sm:$0xff]
    %v172 = vld [vmem:[#allocation1 + $0x9] sm:$0xff]
    %v173 = vld [vmem:[#allocation1 + $0x12] sm:$0xff]
    %v174 = vld [vmem:[#allocation1 + $0x1b] sm:$0xff]
    %v175 = vld [vmem:[#allocation1 + $0x24] sm:$0xff]
    %v176 = vld [vmem:[#allocation1 + $0x2d] sm:$0xff]
    %v177 = vld [vmem:[#allocation1 + $0x36] sm:$0xff]
    %v178 = vld [vmem:[#allocation1 + $0x3f] sm:$0xff]
    %v315 = vunpack.c.l.b16 %v40
    %v316 = vunpack.c.l.b16 %v41
    %v317 = vunpack.c.l.b16 %v42
    %v318 = vunpack.c.l.b16 %v43
    %v319 = vunpack.c.l.b16 %v44
    %v320 = vunpack.c.l.b16 %v45
    %v321 = vunpack.c.l.b16 %v46
    %v322 = vunpack.c.l.b16 %v47
    %v323 = vunpack.c.l.b16 %v48
    %v324 = vunpack.c.l.b16 %v49
    %v325 = vunpack.c.l.b16 %v50
    %v326 = vunpack.c.l.b16 %v51
    %v327 = vunpack.c.l.b16 %v52
    %v328 = vunpack.c.l.b16 %v53
    %v329 = vunpack.c.l.b16 %v54
    %v330 = vunpack.c.l.b16 %v55
    %v331 = vunpack.c.l.b16 %v56
    %v332 = vunpack.c.l.b16 %v57
    %v333 = vunpack.c.l.b16 %v58
    %v334 = vunpack.c.l.b16 %v59
    %v335 = vunpack.c.l.b16 %v60
    %v336 = vunpack.c.l.b16 %v61
    %v337 = vunpack.c.l.b16 %v62
    %v338 = vunpack.c.l.b16 %v63
    %v339 = vunpack.c.l.b16 %v64
    %v340 = vunpack.c.l.b16 %v65
    %v341 = vunpack.c.l.b16 %v66
    %v342 = vunpack.c.l.b16 %v67
    %v343 = vunpack.c.l.b16 %v68
    %v344 = vunpack.c.l.b16 %v69
    %v345 = vunpack.c.l.b16 %v70
    %v346 = vunpack.c.l.b16 %v71
    %v347 = vunpack.c.l.b16 %v72
    %v348 = vunpack.c.l.b16 %v73
    %v349 = vunpack.c.l.b16 %v74
    %v350 = vunpack.c.l.b16 %v75
    %v351 = vunpack.c.l.b16 %v76
    %v352 = vunpack.c.l.b16 %v77
    %v353 = vunpack.c.l.b16 %v78
    %v354 = vunpack.c.l.b16 %v79
    %v355 = vunpack.c.l.b16 %v80
    %v356 = vunpack.c.l.b16 %v81
    %v357 = vunpack.c.l.b16 %v82
    %v358 = vunpack.c.l.b16 %v83
    %v359 = vunpack.c.l.b16 %v84
    %v360 = vunpack.c.l.b16 %v85
    %v361 = vunpack.c.l.b16 %v86
    %v362 = vunpack.c.l.b16 %v87
    %v363 = vunpack.c.l.b16 %v88
    %v364 = vunpack.c.l.b16 %v89
    %v365 = vunpack.c.l.b16 %v90
    %v366 = vunpack.c.l.b16 %v91
    %v367 = vunpack.c.l.b16 %v92
    %v368 = vunpack.c.l.b16 %v93
    %v369 = vunpack.c.l.b16 %v94
    %v370 = vunpack.c.l.b16 %v95
    %v371 = vunpack.c.l.b16 %v96
    %v372 = vunpack.c.l.b16 %v97
    %v373 = vunpack.c.l.b16 %v98
    %v374 = vunpack.c.l.b16 %v99
    %v375 = vunpack.c.l.b16 %v100
    %v376 = vunpack.c.l.b16 %v101
    %v377 = vunpack.c.l.b16 %v102
    %v378 = vunpack.c.l.b16 %v103
    %v379 = vunpack.c.l.b16 %v104
    %v380 = vunpack.c.l.b16 %v105
    %v381 = vunpack.c.l.b16 %v106
    %v382 = vunpack.c.l.b16 %v107
    %v383 = vunpack.c.l.b16 %v108
    %v384 = vunpack.c.l.b16 %v109
    %v385 = vunpack.c.l.b16 %v110
    %v386 = vunpack.c.l.b16 %v111
    %v387 = vunpack.c.l.b16 %v112
    %v388 = vunpack.c.l.b16 %v113
    %v389 = vunpack.c.l.b16 %v114
    %v390 = vunpack.c.l.b16 %v115
    %v391 = vunpack.c.l.b16 %v116
    %v392 = vunpack.c.l.b16 %v117
    %v393 = vunpack.c.l.b16 %v118
    %v394 = vunpack.c.l.b16 %v119
    %v395 = vunpack.c.l.b16 %v120
    %v396 = vunpack.c.l.b16 %v121
    %v397 = vunpack.c.l.b16 %v122
    %v398 = vunpack.c.l.b16 %v123
    %v399 = vunpack.c.l.b16 %v124
    %v400 = vunpack.c.l.b16 %v125
    %v401 = vunpack.c.l.b16 %v126
    %v402 = vunpack.c.l.b16 %v127
    %v403 = vunpack.c.l.b16 %v128
    %v404 = vunpack.c.l.b16 %v129
    %v405 = vunpack.c.l.b16 %v130
    %v406 = vunpack.c.l.b16 %v131
    %v407 = vunpack.c.l.b16 %v132
    %v408 = vunpack.c.l.b16 %v133
    %v409 = vunpack.c.l.b16 %v134
    %v410 = vunpack.c.l.b16 %v135
    %v411 = vunpack.c.l.b16 %v136
    %v412 = vunpack.c.l.b16 %v137
    %v413 = vunpack.c.l.b16 %v138
    %v414 = vunpack.c.l.b16 %v139
    %v415 = vunpack.c.l.b16 %v140
    %v416 = vunpack.c.l.b16 %v141
    %v417 = vunpack.c.l.b16 %v142
    %v418 = vunpack.c.l.b16 %v143
    %v419 = vunpack.c.l.b16 %v144
    %v420 = vunpack.c.l.b16 %v145
    %v421 = vunpack.c.l.b16 %v146
    %v422 = vunpack.c.l.b16 %v147
    %v423 = vunpack.c.l.b16 %v148
    %v424 = vunpack.c.l.b16 %v149
    %v425 = vunpack.c.l.b16 %v150
    %v426 = vunpack.c.l.b16 %v151
    %v427 = vunpack.c.l.b16 %v152
    %v428 = vunpack.c.l.b16 %v153
    %v429 = vunpack.c.l.b16 %v154
    %v430 = vunpack.c.l.b16 %v155
    %v431 = vunpack.c.l.b16 %v156
    %v432 = vunpack.c.l.b16 %v157
    %v433 = vunpack.c.l.b16 %v158
    %v434 = vunpack.c.l.b16 %v159
    %v435 = vunpack.c.l.b16 %v160
    %v436 = vunpack.c.l.b16 %v161
    %v437 = vunpack.c.l.b16 %v162
    %v438 = vunpack.c.l.b16 %v163
    %v439 = vunpack.c.l.b16 %v164
    %v440 = vunpack.c.l.b16 %v165
    %v441 = vunpack.c.l.b16 %v166
    %v442 = vunpack.c.l.b16 %v167
    %v443 = vpack.c.b16 %v316, %v315
    %v444 = vpack.c.b16 %v318, %v317
    %v445 = vpack.c.b16 %v320, %v319
    %v446 = vpack.c.b16 %v322, %v321
    %v447 = vpack.c.b16 %v324, %v323
    %v448 = vpack.c.b16 %v326, %v325
    %v449 = vpack.c.b16 %v328, %v327
    %v450 = vpack.c.b16 %v330, %v329
    %v451 = vpack.c.b16 %v332, %v331
    %v452 = vpack.c.b16 %v334, %v333
    %v453 = vpack.c.b16 %v336, %v335
    %v454 = vpack.c.b16 %v338, %v337
    %v455 = vpack.c.b16 %v340, %v339
    %v456 = vpack.c.b16 %v342, %v341
    %v457 = vpack.c.b16 %v344, %v343
    %v458 = vpack.c.b16 %v346, %v345
    %v459 = vpack.c.b16 %v348, %v347
    %v460 = vpack.c.b16 %v350, %v349
    %v461 = vpack.c.b16 %v352, %v351
    %v462 = vpack.c.b16 %v354, %v353
    %v463 = vpack.c.b16 %v356, %v355
    %v464 = vpack.c.b16 %v358, %v357
    %v465 = vpack.c.b16 %v360, %v359
    %v466 = vpack.c.b16 %v362, %v361
    %v467 = vpack.c.b16 %v364, %v363
    %v468 = vpack.c.b16 %v366, %v365
    %v469 = vpack.c.b16 %v368, %v367
    %v470 = vpack.c.b16 %v370, %v369
    %v471 = vpack.c.b16 %v372, %v371
    %v472 = vpack.c.b16 %v374, %v373
    %v473 = vpack.c.b16 %v376, %v375
    %v474 = vpack.c.b16 %v378, %v377
    %v475 = vpack.c.b16 %v380, %v379
    %v476 = vpack.c.b16 %v382, %v381
    %v477 = vpack.c.b16 %v384, %v383
    %v478 = vpack.c.b16 %v386, %v385
    %v479 = vpack.c.b16 %v388, %v387
    %v480 = vpack.c.b16 %v390, %v389
    %v481 = vpack.c.b16 %v392, %v391
    %v482 = vpack.c.b16 %v394, %v393
    %v483 = vpack.c.b16 %v396, %v395
    %v484 = vpack.c.b16 %v398, %v397
    %v485 = vpack.c.b16 %v400, %v399
    %v486 = vpack.c.b16 %v402, %v401
    %v487 = vpack.c.b16 %v404, %v403
    %v488 = vpack.c.b16 %v406, %v405
    %v489 = vpack.c.b16 %v408, %v407
    %v490 = vpack.c.b16 %v410, %v409
    %v491 = vpack.c.b16 %v412, %v411
    %v492 = vpack.c.b16 %v414, %v413
    %v493 = vpack.c.b16 %v416, %v415
    %v494 = vpack.c.b16 %v418, %v417
    %v495 = vpack.c.b16 %v420, %v419
    %v496 = vpack.c.b16 %v422, %v421
    %v497 = vpack.c.b16 %v424, %v423
    %v498 = vpack.c.b16 %v426, %v425
    %v499 = vpack.c.b16 %v428, %v427
    %v500 = vpack.c.b16 %v430, %v429
    %v501 = vpack.c.b16 %v432, %v431
    %v502 = vpack.c.b16 %v434, %v433
    %v503 = vpack.c.b16 %v436, %v435
    %v504 = vpack.c.b16 %v438, %v437
    %v505 = vpack.c.b16 %v440, %v439
    %v506 = vpack.c.b16 %v442, %v441
    %571 = vmatpush.bf16.msra.mxu0 %v450
    %572 = vmatpush.bf16.msra.mxu0 %v449
    %573 = vmatpush.bf16.msra.mxu0 %v448
    %574 = vmatpush.bf16.msra.mxu0 %v447
    %575 = vmatpush.bf16.msra.mxu0 %v446
    %576 = vmatpush.bf16.msra.mxu0 %v445
    %577 = vmatpush.bf16.msra.mxu0 %v444
    %578 = vmatpush.bf16.msra.mxu0 %v443
    %579 = vmatmul.bf16.gmra.mxu0 %v171
    %v580 = vpop.f32.mrf.mxu0
    %v581 = vadd.f32 %v168, %v580
    %v582 = vpop.f32.mrf.mxu0
    %583 = vdwg.mxu0
    %584 = vmatpush.bf16.msra.mxu0 %v458
    %585 = vmatpush.bf16.msra.mxu0 %v457
    %586 = vmatpush.bf16.msra.mxu0 %v456
    %587 = vmatpush.bf16.msra.mxu0 %v455
    %588 = vmatpush.bf16.msra.mxu0 %v454
    %589 = vmatpush.bf16.msra.mxu0 %v453
    %590 = vmatpush.bf16.msra.mxu0 %v452
    %591 = vmatpush.bf16.msra.mxu0 %v451
    %592 = vmatmul.bf16.gmra.mxu0 %v172
    %v593 = vpop.f32.mrf.mxu0
    %v594 = vadd.f32 %v581, %v593
    %v595 = vpop.f32.mrf.mxu0
    %596 = vdwg.mxu0
    %597 = vmatpush.bf16.msra.mxu0 %v466
    %598 = vmatpush.bf16.msra.mxu0 %v465
    %599 = vmatpush.bf16.msra.mxu0 %v464
    %600 = vmatpush.bf16.msra.mxu0 %v463
    %601 = vmatpush.bf16.msra.mxu0 %v462
    %602 = vmatpush.bf16.msra.mxu0 %v461
    %603 = vmatpush.bf16.msra.mxu0 %v460
    %604 = vmatpush.bf16.msra.mxu0 %v459
    %605 = vmatmul.bf16.gmra.mxu0 %v173
    %v606 = vpop.f32.mrf.mxu0
    %v607 = vadd.f32 %v594, %v606
    %v608 = vpop.f32.mrf.mxu0
    %609 = vdwg.mxu0
    %610 = vmatpush.bf16.msra.mxu0 %v474
    %611 = vmatpush.bf16.msra.mxu0 %v473
    %612 = vmatpush.bf16.msra.mxu0 %v472
    %613 = vmatpush.bf16.msra.mxu0 %v471
    %614 = vmatpush.bf16.msra.mxu0 %v470
    %615 = vmatpush.bf16.msra.mxu0 %v469
    %616 = vmatpush.bf16.msra.mxu0 %v468
    %617 = vmatpush.bf16.msra.mxu0 %v467
    %618 = vmatmul.bf16.gmra.mxu0 %v174
    %v619 = vpop.f32.mrf.mxu0
    %v620 = vadd.f32 %v607, %v619
    %v621 = vpop.f32.mrf.mxu0
    %622 = vdwg.mxu0
    %623 = vmatpush.bf16.msra.mxu0 %v482
    %624 = vmatpush.bf16.msra.mxu0 %v481
    %625 = vmatpush.bf16.msra.mxu0 %v480
    %626 = vmatpush.bf16.msra.mxu0 %v479
    %627 = vmatpush.bf16.msra.mxu0 %v478
    %628 = vmatpush.bf16.msra.mxu0 %v477
    %629 = vmatpush.bf16.msra.mxu0 %v476
    %630 = vmatpush.bf16.msra.mxu0 %v475
    %631 = vmatmul.bf16.gmra.mxu0 %v175
    %v632 = vpop.f32.mrf.mxu0
    %v633 = vadd.f32 %v620, %v632
    %v634 = vpop.f32.mrf.mxu0
    %635 = vdwg.mxu0
    %636 = vmatpush.bf16.msra.mxu0 %v490
    %637 = vmatpush.bf16.msra.mxu0 %v489
    %638 = vmatpush.bf16.msra.mxu0 %v488
    %639 = vmatpush.bf16.msra.mxu0 %v487
    %640 = vmatpush.bf16.msra.mxu0 %v486
    %641 = vmatpush.bf16.msra.mxu0 %v485
    %642 = vmatpush.bf16.msra.mxu0 %v484
    %643 = vmatpush.bf16.msra.mxu0 %v483
    %644 = vmatmul.bf16.gmra.mxu0 %v176
    %v645 = vpop.f32.mrf.mxu0
    %v646 = vadd.f32 %v633, %v645
    %v647 = vpop.f32.mrf.mxu0
    %648 = vdwg.mxu0
    %649 = vmatpush.bf16.msra.mxu0 %v498
    %650 = vmatpush.bf16.msra.mxu0 %v497
    %651 = vmatpush.bf16.msra.mxu0 %v496
    %652 = vmatpush.bf16.msra.mxu0 %v495
    %653 = vmatpush.bf16.msra.mxu0 %v494
    %654 = vmatpush.bf16.msra.mxu0 %v493
    %655 = vmatpush.bf16.msra.mxu0 %v492
    %656 = vmatpush.bf16.msra.mxu0 %v491
    %657 = vmatmul.bf16.gmra.mxu0 %v177
    %v658 = vpop.f32.mrf.mxu0
    %v659 = vadd.f32 %v646, %v658
    %v660 = vpop.f32.mrf.mxu0
    %661 = vdwg.mxu0
    %662 = vmatpush.bf16.msra.mxu0 %v506
    %663 = vmatpush.bf16.msra.mxu0 %v505
    %664 = vmatpush.bf16.msra.mxu0 %v504
    %665 = vmatpush.bf16.msra.mxu0 %v503
    %666 = vmatpush.bf16.msra.mxu0 %v502
    %667 = vmatpush.bf16.msra.mxu0 %v501
    %668 = vmatpush.bf16.msra.mxu0 %v500
    %669 = vmatpush.bf16.msra.mxu0 %v499
    %670 = vmatmul.bf16.gmra.mxu0 %v178
    %v671 = vpop.f32.mrf.mxu0
    %v672 = vadd.f32 %v659, %v671
    %v673 = vpop.f32.mrf.mxu0
    %674 = vdwg.mxu0
    %v675 = vmax.f32 %v672, 0.0
    %v676 = vpack.c.bf16 %v675, %v675
    %v677 = vld [vmem:[%s3] sm:$0xff]
    %v678 = vld [vmem:[%s3 + $0x8] sm:$0xff]
    %v679 = vld [vmem:[%s3 + $0x10] sm:$0xff]
    %v680 = vld [vmem:[%s3 + $0x18] sm:$0xff]
    %v681 = vld [vmem:[%s3 + $0x20] sm:$0xff]
    %v682 = vld [vmem:[%s3 + $0x28] sm:$0xff]
    %v683 = vld [vmem:[%s3 + $0x30] sm:$0xff]
    %v684 = vld [vmem:[%s3 + $0x38] sm:$0xff]
    %v685 = vld [vmem:[%s3 + $0x40] sm:$0xff]
    %v686 = vld [vmem:[%s3 + $0x48] sm:$0xff]
    %v687 = vld [vmem:[%s3 + $0x50] sm:$0xff]
    %v688 = vld [vmem:[%s3 + $0x58] sm:$0xff]
    %v689 = vld [vmem:[%s3 + $0x60] sm:$0xff]
    %v690 = vld [vmem:[%s3 + $0x68] sm:$0xff]
    %v691 = vld [vmem:[%s3 + $0x70] sm:$0xff]
    %v692 = vld [vmem:[%s3 + $0x78] sm:$0xff]
    %v693 = vld [vmem:[%s1] sm:$0x3]
    %v694 = vld [vmem:[%s4] sm:$0xff]
    %v695 = vld [vmem:[%s4 + $0x8] sm:$0xff]
    %vm696 = vcmask 64512
    %v698 = vsel %vm696, %v693, 0
    %700 = vmatpush.msra.mxu0 0.0
    %701 = vmatpush.msra.mxu0 0.0
    %702 = vmatpush.msra.mxu0 0.0
    %703 = vmatpush.msra.mxu0 0.0
    %704 = vmatpush.msra.mxu0 0.0
    %705 = vmatpush.msra.mxu0 0.0
    %706 = vmatpush.msra.mxu0 0.0
    %707 = vmatpush.msra.mxu0 0.0
    %708 = vmatpush.msra.mxu0 0.0
    %709 = vmatpush.msra.mxu0 0.0
    %710 = vmatpush.msra.mxu0 0.0
    %711 = vmatpush.msra.mxu0 0.0
    %712 = vmatpush.msra.mxu0 0.0
    %713 = vmatpush.msra.mxu0 0.0
    %714 = vmatpush.msra.mxu0 0.0
    %715 = vmatpush.msra.mxu0 %v694
    %716 = vmatmul.f32.gmra.mxu0 %v698
    %v717 = vpop.f32.mrf.mxu0
    %v718 = vadd.f32 0.0, %v717
    %719 = vdwg.mxu0
    %720 = vmatpush.msra.mxu0 0.0
    %721 = vmatpush.msra.mxu0 0.0
    %722 = vmatpush.msra.mxu0 0.0
    %723 = vmatpush.msra.mxu0 0.0
    %724 = vmatpush.msra.mxu0 0.0
    %725 = vmatpush.msra.mxu0 0.0
    %726 = vmatpush.msra.mxu0 0.0
    %727 = vmatpush.msra.mxu0 0.0
    %728 = vmatpush.msra.mxu0 0.0
    %729 = vmatpush.msra.mxu0 0.0
    %730 = vmatpush.msra.mxu0 0.0
    %731 = vmatpush.msra.mxu0 0.0
    %732 = vmatpush.msra.mxu0 0.0
    %733 = vmatpush.msra.mxu0 0.0
    %734 = vmatpush.msra.mxu0 0.0
    %735 = vmatpush.msra.mxu0 %v695
    %736 = vmatmul.f32.gmra.mxu0 %v698
    %v737 = vpop.f32.mrf.mxu0
    %v738 = vadd.f32 0.0, %v737
    %739 = vdwg.mxu0
    %v756 = vunpack.c.l.b16 %v677
    %v757 = vunpack.c.h.b16 %v677
    %v758 = vunpack.c.l.b16 %v678
    %v759 = vunpack.c.h.b16 %v678
    %v760 = vunpack.c.l.b16 %v679
    %v761 = vunpack.c.h.b16 %v679
    %v762 = vunpack.c.l.b16 %v680
    %v763 = vunpack.c.h.b16 %v680
    %v764 = vunpack.c.l.b16 %v681
    %v765 = vunpack.c.h.b16 %v681
    %v766 = vunpack.c.l.b16 %v682
    %v767 = vunpack.c.h.b16 %v682
    %v768 = vunpack.c.l.b16 %v683
    %v769 = vunpack.c.h.b16 %v683
    %v770 = vunpack.c.l.b16 %v684
    %v771 = vunpack.c.h.b16 %v684
    %v772 = vunpack.c.l.b16 %v685
    %v773 = vunpack.c.h.b16 %v685
    %v774 = vunpack.c.l.b16 %v686
    %v775 = vunpack.c.h.b16 %v686
    %v776 = vunpack.c.l.b16 %v687
    %v777 = vunpack.c.h.b16 %v687
    %v778 = vunpack.c.l.b16 %v688
    %v779 = vunpack.c.h.b16 %v688
    %v780 = vunpack.c.l.b16 %v689
    %v781 = vunpack.c.h.b16 %v689
    %v782 = vunpack.c.l.b16 %v690
    %v783 = vunpack.c.h.b16 %v690
    %v784 = vunpack.c.l.b16 %v691
    %v785 = vunpack.c.h.b16 %v691
    %v786 = vunpack.c.l.b16 %v692
    %v787 = vunpack.c.h.b16 %v692
    %v788 = vpack.c.b16 %v758, %v756
    %v789 = vpack.c.b16 %v759, %v757
    %v790 = vpack.c.b16 %v762, %v760
    %v791 = vpack.c.b16 %v763, %v761
    %v792 = vpack.c.b16 %v766, %v764
    %v793 = vpack.c.b16 %v767, %v765
    %v794 = vpack.c.b16 %v770, %v768
    %v795 = vpack.c.b16 %v771, %v769
    %v796 = vpack.c.b16 %v774, %v772
    %v797 = vpack.c.b16 %v775, %v773
    %v798 = vpack.c.b16 %v778, %v776
    %v799 = vpack.c.b16 %v779, %v777
    %v800 = vpack.c.b16 %v782, %v780
    %v801 = vpack.c.b16 %v783, %v781
    %v802 = vpack.c.b16 %v786, %v784
    %v803 = vpack.c.b16 %v787, %v785
    %820 = vmatpush.bf16.msra.mxu0 %v802
    %821 = vmatpush.bf16.msra.mxu0 %v800
    %822 = vmatpush.bf16.msra.mxu0 %v798
    %823 = vmatpush.bf16.msra.mxu0 %v796
    %824 = vmatpush.bf16.msra.mxu0 %v794
    %825 = vmatpush.bf16.msra.mxu0 %v792
    %826 = vmatpush.bf16.msra.mxu0 %v790
    %827 = vmatpush.bf16.msra.mxu0 %v788
    %828 = vmatmul.bf16.gmra.mxu0 %v676
    %v829 = vpop.f32.mrf.mxu0
    %v830 = vadd.f32 %v718, %v829
    %v831 = vpop.f32.mrf.mxu0
    %832 = vdwg.mxu0
    %833 = vmatpush.bf16.msra.mxu0 %v803
    %834 = vmatpush.bf16.msra.mxu0 %v801
    %835 = vmatpush.bf16.msra.mxu0 %v799
    %836 = vmatpush.bf16.msra.mxu0 %v797
    %837 = vmatpush.bf16.msra.mxu0 %v795
    %838 = vmatpush.bf16.msra.mxu0 %v793
    %839 = vmatpush.bf16.msra.mxu0 %v791
    %840 = vmatpush.bf16.msra.mxu0 %v789
    %841 = vmatmul.bf16.gmra.mxu0 %v676
    %v842 = vpop.f32.mrf.mxu0
    %v843 = vadd.f32 %v738, %v842
    %v844 = vpop.f32.mrf.mxu0
    %845 = vdwg.mxu0
    %s846 = scalar_lea.vmem %s4, 16
    %v847 = vld [vmem:[%s846] ss:$8 sm:$0x3]
    %v849 = vperm.slane %v847, 0
    %v850 = vperm.slane %v847, 1
    %v853 = vadd.f32 %v830, %v849
    %v854 = vadd.f32 %v843, %v850
    %v855 = vmax.f32 %v853, 0.0
    %v856 = vmax.f32 %v854, 0.0
    %v857 = vmax.f32 %v855, %v856
    %859 = vrot.lane.b32.xlu0 %v857, 64
    %v860 = vpop.permute.xlu0 %859
    %v862 = vmax.f32 %v857, %v860
    %v863 = vld [vmem:[%s5] sm:$0xff]
    %v864 = vld [vmem:[%s5 + $0x8] sm:$0xff]
    %v865 = vld [vmem:[%s5 + $0x10] sm:$0xff]
    %v866 = vld [vmem:[%s5 + $0x18] sm:$0xff]
    %v867 = vld [vmem:[%s5 + $0x20] sm:$0xff]
    %v868 = vld [vmem:[%s5 + $0x28] sm:$0xff]
    %v869 = vld [vmem:[%s5 + $0x30] sm:$0xff]
    %v870 = vld [vmem:[%s5 + $0x38] sm:$0xff]
    %v871 = vld [vmem:[%s4 + $0x12] ss:$0 sm:$0xff]
    %vm872 = vcmask 523264
    %v874 = vsel %vm872, %v862, 0
    %876 = vmatpush.msra.mxu0 0.0
    %877 = vmatpush.msra.mxu0 0.0
    %878 = vmatpush.msra.mxu0 0.0
    %879 = vmatpush.msra.mxu0 0.0
    %880 = vmatpush.msra.mxu0 0.0
    %881 = vmatpush.msra.mxu0 0.0
    %882 = vmatpush.msra.mxu0 0.0
    %883 = vmatpush.msra.mxu0 0.0
    %884 = vmatpush.msra.mxu0 %v870
    %885 = vmatpush.msra.mxu0 %v869
    %886 = vmatpush.msra.mxu0 %v868
    %887 = vmatpush.msra.mxu0 %v867
    %888 = vmatpush.msra.mxu0 %v866
    %889 = vmatpush.msra.mxu0 %v865
    %890 = vmatpush.msra.mxu0 %v864
    %891 = vmatpush.msra.mxu0 %v863
    %892 = vmatmul.f32.gmra.mxu0 %v874
    %v893 = vpop.f32.mrf.mxu0
    %v894 = vadd.f32 %v871, %v893
    %895 = vdwg.mxu0
    %vm896 = vcmask 9216
    %897 = vst.msk [vmem:[%s6] sm:$0x3] %vm896, %v894
    // Predicated region
    $region30: #{critic_equivariant_forward.1} parent=1 // pred_check
      _
    $region31: #{critic_equivariant_forward.1} parent=1 // pred_check_branch
      %899 = sbr.rel (0) target = $region33
    $region32: #{critic_equivariant_forward.1} parent=1 // pred_region
      _
    $region33: #{critic_equivariant_forward.1} parent=1 // pred_fallthru
      _
    // Predicated region
    $region34: #{critic_equivariant_forward.1} parent=1 // pred_check
      _
    $region35: #{critic_equivariant_forward.1} parent=1 // pred_check_branch
      %901 = sbr.rel (0) target = $region37
    $region36: #{critic_equivariant_forward.1} parent=1 // pred_region
      _
    $region37: #{critic_equivariant_forward.1} parent=1 // pred_fallthru
      _
    %902 = vsyncpa [#allocation3], 1

</llo_original>
